<compile_context>
chip_gen: v7x
topology: tpu7x:2x2x1
jax: 0.10.0
libtpu: 0.0.40
codegen_flags: <defaults>
</compile_context>

<pallas_src>
import functools

import jax
import jax.numpy as jnp
from jax.experimental import pallas as pl
from jax.experimental.pallas import tpu as pltpu


def _trunk_branch_kernel(x_ref, w_ref, b_ref, m_ref, o_ref, *, H, W, res_scale):
    # x_ref : (1, Cp, H*W)   one image, channels on sublanes, spatial on lanes
    # w_ref : (4, Cp, 9*Cp)  per-conv weights, im2col-reshaped
    # b_ref : (4, Cp, 1)     per-conv biases
    # m_ref : (9, H*W)       tap-validity masks (1.0 inside image, 0.0 at halo)
    # o_ref : (1, Cp, H*W)
    HW = H * W

    x = x_ref[0].astype(jnp.float32)            # (Cp, HW)
    masks = m_ref[...].astype(jnp.float32)      # (9, HW)
    # Hoist the 9 mask-row slices out of the conv loop (done once, reused 4x).
    mrow = [masks[t:t + 1] for t in range(9)]   # each (1, HW)

    offsets = tuple(dh * W + dw for dh in (-1, 0, 1) for dw in (-1, 0, 1))

    def conv3x3(inp, idx, relu):
        # Build the im2col matrix by stacking the 9 shifted+masked copies of
        # inp along sublanes, then do ONE MXU contraction.
        cols = []
        for t, off in enumerate(offsets):
            if off == 0:
                cols.append(inp)                                   # center: always valid
            else:
                shifted = pltpu.roll(inp, (-off) % HW, 1)          # XLU, cheap
                cols.append(shifted * mrow[t])
        patches = jnp.concatenate(cols, axis=0)                    # (9*Cp, HW)
        w2 = w_ref[idx].astype(jnp.float32)                        # (Cp, 9*Cp)
        out = jnp.dot(w2, patches, preferred_element_type=jnp.float32)  # (Cp, HW)
        out = out + b_ref[idx].astype(jnp.float32)                 # lane broadcast
        if relu:
            out = jnp.maximum(out, 0.0)
        return out

    # ResBlock 1: conv -> ReLU -> conv; out = res * res_scale + x
    res = conv3x3(conv3x3(x, 0, True), 1, False)
    if res_scale != 1.0:
        res = res * res_scale
    r1 = res + x

    # ResBlock 2
    res = conv3x3(conv3x3(r1, 2, True), 3, False)
    if res_scale != 1.0:
        res = res * res_scale
    o_ref[0] = (res + r1).astype(o_ref.dtype)


def _pack_params(params, C, Cp):
    """OIHW conv weights -> (4, Cp, 9*Cp) im2col matrices; biases -> (4, Cp, 1)."""
    ws, bs = [], []
    for (w1, b1, w2, b2) in params:
        for w, b in ((w1, b1), (w2, b2)):
            wp = jnp.pad(w, ((0, Cp - C), (0, Cp - C), (0, 0), (0, 0)))
            # W2[co, (kh*3+kw)*Cp + ci] = w[co, ci, kh, kw]
            ws.append(jnp.transpose(wp, (0, 2, 3, 1)).reshape(Cp, 9 * Cp))
            bs.append(jnp.pad(b, (0, Cp - C)).reshape(Cp, 1))
    return jnp.stack(ws), jnp.stack(bs)


def _make_tap_masks(H, W):
    """(9, H*W) float32 validity masks for the 3x3 taps over a flattened image."""
    pos = jnp.arange(H * W, dtype=jnp.int32)
    row = pos // W
    col = pos % W
    masks = []
    for dh in (-1, 0, 1):
        for dw in (-1, 0, 1):
            valid = ((row + dh >= 0) & (row + dh < H)
                     & (col + dw >= 0) & (col + dw < W))
            masks.append(valid.astype(jnp.float32))
    return jnp.stack(masks)  # (9, H*W)


def trunk_branch(x_nchw, params, *, res_scale=1.0):
    """TrunkBranch forward. x_nchw: (N, C, H, W); params: 2 tuples of (w1,b1,w2,b2),
    weights in PyTorch OIHW layout (C, C, 3, 3)."""
    N, C, H, W = x_nchw.shape
    HW = H * W
    Cp = ((C + 7) // 8) * 8  # sublane-align channels

    w_all, b_all = _pack_params(params, C, Cp)           # (4,Cp,9Cp), (4,Cp,1)
    mask_arr = _make_tap_masks(H, W)                     # (9, HW)

    x_p = x_nchw
    if Cp != C:
        x_p = jnp.pad(x_nchw, ((0, 0), (0, Cp - C), (0, 0), (0, 0)))
    x_flat = x_p.reshape(N, Cp, HW)                      # spatial flattened onto lanes

    kernel = functools.partial(_trunk_branch_kernel, H=H, W=W, res_scale=res_scale)

    out_flat = pl.pallas_call(
        kernel,
        out_shape=jax.ShapeDtypeStruct((N, Cp, HW), x_nchw.dtype),
        grid_spec=pltpu.PrefetchScalarGridSpec(
            num_scalar_prefetch=0,
            grid=(N,),
            in_specs=[
                pl.BlockSpec((1, Cp, HW), lambda n: (n, 0, 0)),
                pl.BlockSpec((4, Cp, 9 * Cp), lambda n: (0, 0, 0)),
                pl.BlockSpec((4, Cp, 1), lambda n: (0, 0, 0)),
                pl.BlockSpec((9, HW), lambda n: (0, 0)),
            ],
            out_specs=pl.BlockSpec((1, Cp, HW), lambda n: (n, 0, 0)),
        ),
        compiler_params=pltpu.CompilerParams(
            dimension_semantics=("parallel",),
        ),
    )(x_flat, w_all, b_all, mask_arr)

    out = out_flat.reshape(N, Cp, H, W)
    return out[:, :C] if Cp != C else out


def _reference_trunk_branch(x, params, res_scale=1.0):
    """Pure-JAX/XLA reference mirroring the PyTorch module (NCHW, OIHW)."""
    def conv(h, w, b):
        y = jax.lax.conv_general_dilated(
            h, w, window_strides=(1, 1), padding=((1, 1), (1, 1)),
            dimension_numbers=("NCHW", "OIHW", "NCHW"),
            precision=jax.lax.Precision.HIGHEST)
        return y + b[None, :, None, None]

    out = x
    for (w1, b1, w2, b2) in params:
        h = jnp.maximum(conv(out, w1, b1), 0.0)
        out = conv(h, w2, b2) * res_scale + out
    return out


if __name__ == "__main__":
    key = jax.random.PRNGKey(0)
    N, C, H, W = 2, 4, 16, 16  # PyTorch NCHW shape

    key, kx = jax.random.split(key)
    x = jax.random.normal(kx, (N, C, H, W), dtype=jnp.float32)

    # Two ResBlocks, two convs each; PyTorch-style OIHW weights + bias.
    params = []
    for _ in range(2):
        blk = []
        for _ in range(2):
            key, kw, kb = jax.random.split(key, 3)
            blk.append(0.1 * jax.random.normal(kw, (C, C, 3, 3), dtype=jnp.float32))
            blk.append(0.05 * jax.random.normal(kb, (C,), dtype=jnp.float32))
        params.append(tuple(blk))

    out = trunk_branch(x, params)
    jax.block_until_ready(out)

    assert out.shape == (N, C, H, W)
    assert bool(jnp.all(jnp.isfinite(out)))

    ref = _reference_trunk_branch(x, params)
    if not jnp.allclose(out, ref, atol=1e-3, rtol=1e-3):
        err = float(jnp.max(jnp.abs(out - ref)))
        raise AssertionError(f"mismatch vs XLA reference: max abs err {err}")

    print("KERNEL_OK")
</pallas_src>

<mosaic_0001>
module attributes {stable_mosaic.version = 11 : i64} {
  func.func @_trunk_branch_kernel(%arg0: i32, %arg1: memref<1x8x256xf32, #tpu.memory_space<vmem>>, %arg2: memref<4x8x72xf32, #tpu.memory_space<vmem>>, %arg3: memref<4x8x1xf32, #tpu.memory_space<vmem>>, %arg4: memref<9x256xf32, #tpu.memory_space<vmem>>, %arg5: memref<1x8x256xf32, #tpu.memory_space<vmem>>) attributes {dimension_semantics = [#tpu.dimension_semantics<parallel>], iteration_bounds = array<i64: 2>, scalar_prefetch = 0 : i64, scratch_operands = 0 : i64, tpu.core_type = #tpu.core_type<tc>, window_params = [{transform_indices = @transform_0, window_bounds = array<i64: 1, 8, 256>}, {pipeline_mode = #tpu.pipeline_mode<synchronous>, transform_indices = @transform_1, window_bounds = array<i64: 4, 8, 72>}, {pipeline_mode = #tpu.pipeline_mode<synchronous>, transform_indices = @transform_2, window_bounds = array<i64: 4, 8, 1>}, {pipeline_mode = #tpu.pipeline_mode<synchronous>, transform_indices = @transform_3, window_bounds = array<i64: 9, 256>}, {transform_indices = @transform_4, window_bounds = array<i64: 1, 8, 256>}]} {
    %c0 = arith.constant 0 : index
    %c0_0 = arith.constant 0 : index
    %c0_1 = arith.constant 0 : index
    %0 = vector.load %arg1[%c0, %c0_0, %c0_1] : memref<1x8x256xf32, #tpu.memory_space<vmem>>, vector<1x8x256xf32>
    %1 = vector.shape_cast %0 : vector<1x8x256xf32> to vector<8x256xf32>
    %c0_2 = arith.constant 0 : index
    %c0_3 = arith.constant 0 : index
    %2 = vector.load %arg4[%c0_2, %c0_3] : memref<9x256xf32, #tpu.memory_space<vmem>>, vector<9x256xf32>
    %3 = vector.extract_strided_slice %2 {offsets = [0, 0], sizes = [1, 256], strides = [1, 1]} : vector<9x256xf32> to vector<1x256xf32>
    %4 = vector.extract_strided_slice %2 {offsets = [1, 0], sizes = [1, 256], strides = [1, 1]} : vector<9x256xf32> to vector<1x256xf32>
    %5 = vector.extract_strided_slice %2 {offsets = [2, 0], sizes = [1, 256], strides = [1, 1]} : vector<9x256xf32> to vector<1x256xf32>
    %6 = vector.extract_strided_slice %2 {offsets = [3, 0], sizes = [1, 256], strides = [1, 1]} : vector<9x256xf32> to vector<1x256xf32>
    %7 = vector.extract_strided_slice %2 {offsets = [5, 0], sizes = [1, 256], strides = [1, 1]} : vector<9x256xf32> to vector<1x256xf32>
    %8 = vector.extract_strided_slice %2 {offsets = [6, 0], sizes = [1, 256], strides = [1, 1]} : vector<9x256xf32> to vector<1x256xf32>
    %9 = vector.extract_strided_slice %2 {offsets = [7, 0], sizes = [1, 256], strides = [1, 1]} : vector<9x256xf32> to vector<1x256xf32>
    %10 = vector.extract_strided_slice %2 {offsets = [8, 0], sizes = [1, 256], strides = [1, 1]} : vector<9x256xf32> to vector<1x256xf32>
    %c17_i32 = arith.constant 17 : i32
    %11 = tpu.dynamic_rotate %1 by %c17_i32 dim 1 : vector<8x256xf32>, i32 -> vector<8x256xf32>
    %12 = vector.broadcast %3 : vector<1x256xf32> to vector<8x256xf32>
    %13 = arith.mulf %11, %12 : vector<8x256xf32>
    %c16_i32 = arith.constant 16 : i32
    %14 = tpu.dynamic_rotate %1 by %c16_i32 dim 1 : vector<8x256xf32>, i32 -> vector<8x256xf32>
    %15 = vector.broadcast %4 : vector<1x256xf32> to vector<8x256xf32>
    %16 = arith.mulf %14, %15 : vector<8x256xf32>
    %c15_i32 = arith.constant 15 : i32
    %17 = tpu.dynamic_rotate %1 by %c15_i32 dim 1 : vector<8x256xf32>, i32 -> vector<8x256xf32>
    %18 = vector.broadcast %5 : vector<1x256xf32> to vector<8x256xf32>
    %19 = arith.mulf %17, %18 : vector<8x256xf32>
    %c1_i32 = arith.constant 1 : i32
    %20 = tpu.dynamic_rotate %1 by %c1_i32 dim 1 : vector<8x256xf32>, i32 -> vector<8x256xf32>
    %21 = vector.broadcast %6 : vector<1x256xf32> to vector<8x256xf32>
    %22 = arith.mulf %20, %21 : vector<8x256xf32>
    %c255_i32 = arith.constant 255 : i32
    %23 = tpu.dynamic_rotate %1 by %c255_i32 dim 1 : vector<8x256xf32>, i32 -> vector<8x256xf32>
    %24 = vector.broadcast %7 : vector<1x256xf32> to vector<8x256xf32>
    %25 = arith.mulf %23, %24 : vector<8x256xf32>
    %c241_i32 = arith.constant 241 : i32
    %26 = tpu.dynamic_rotate %1 by %c241_i32 dim 1 : vector<8x256xf32>, i32 -> vector<8x256xf32>
    %27 = vector.broadcast %8 : vector<1x256xf32> to vector<8x256xf32>
    %28 = arith.mulf %26, %27 : vector<8x256xf32>
    %c240_i32 = arith.constant 240 : i32
    %29 = tpu.dynamic_rotate %1 by %c240_i32 dim 1 : vector<8x256xf32>, i32 -> vector<8x256xf32>
    %30 = vector.broadcast %9 : vector<1x256xf32> to vector<8x256xf32>
    %31 = arith.mulf %29, %30 : vector<8x256xf32>
    %c239_i32 = arith.constant 239 : i32
    %32 = tpu.dynamic_rotate %1 by %c239_i32 dim 1 : vector<8x256xf32>, i32 -> vector<8x256xf32>
    %33 = vector.broadcast %10 : vector<1x256xf32> to vector<8x256xf32>
    %34 = arith.mulf %32, %33 : vector<8x256xf32>
    %35 = tpu.concatenate %13, %16, %19, %22, %1, %25, %28, %31, %34 in 0 : vector<8x256xf32>, vector<8x256xf32>, vector<8x256xf32>, vector<8x256xf32>, vector<8x256xf32>, vector<8x256xf32>, vector<8x256xf32>, vector<8x256xf32>, vector<8x256xf32> -> vector<72x256xf32>
    %c0_4 = arith.constant 0 : index
    %c0_5 = arith.constant 0 : index
    %c0_6 = arith.constant 0 : index
    %36 = vector.load %arg2[%c0_4, %c0_5, %c0_6] : memref<4x8x72xf32, #tpu.memory_space<vmem>>, vector<1x8x72xf32>
    %37 = vector.shape_cast %36 : vector<1x8x72xf32> to vector<8x72xf32>
    %cst = arith.constant dense<0.000000e+00> : vector<8x256xf32>
    %38 = tpu.matmul %37, %35, %cst {dimension_numbers = #tpu.dot_dimension_numbers<[1], [0], [0], [1], [0, 0, 1, 1], [], []>} : vector<8x72xf32>, vector<72x256xf32>, vector<8x256xf32> -> vector<8x256xf32>
    %c0_7 = arith.constant 0 : index
    %c0_8 = arith.constant 0 : index
    %c0_9 = arith.constant 0 : index
    %39 = vector.load %arg3[%c0_7, %c0_8, %c0_9] : memref<4x8x1xf32, #tpu.memory_space<vmem>>, vector<1x8x1xf32>
    %40 = vector.shape_cast %39 : vector<1x8x1xf32> to vector<8x1xf32>
    %41 = vector.broadcast %40 : vector<8x1xf32> to vector<8x256xf32>
    %42 = arith.addf %38, %41 : vector<8x256xf32>
    %cst_10 = arith.constant 0.000000e+00 : f32
    %43 = vector.broadcast %cst_10 : f32 to vector<8x256xf32>
    %44 = arith.maximumf %42, %43 : vector<8x256xf32>
    %c17_i32_11 = arith.constant 17 : i32
    %45 = tpu.dynamic_rotate %44 by %c17_i32_11 dim 1 : vector<8x256xf32>, i32 -> vector<8x256xf32>
    %46 = vector.broadcast %3 : vector<1x256xf32> to vector<8x256xf32>
    %47 = arith.mulf %45, %46 : vector<8x256xf32>
    %c16_i32_12 = arith.constant 16 : i32
    %48 = tpu.dynamic_rotate %44 by %c16_i32_12 dim 1 : vector<8x256xf32>, i32 -> vector<8x256xf32>
    %49 = vector.broadcast %4 : vector<1x256xf32> to vector<8x256xf32>
    %50 = arith.mulf %48, %49 : vector<8x256xf32>
    %c15_i32_13 = arith.constant 15 : i32
    %51 = tpu.dynamic_rotate %44 by %c15_i32_13 dim 1 : vector<8x256xf32>, i32 -> vector<8x256xf32>
    %52 = vector.broadcast %5 : vector<1x256xf32> to vector<8x256xf32>
    %53 = arith.mulf %51, %52 : vector<8x256xf32>
    %c1_i32_14 = arith.constant 1 : i32
    %54 = tpu.dynamic_rotate %44 by %c1_i32_14 dim 1 : vector<8x256xf32>, i32 -> vector<8x256xf32>
    %55 = vector.broadcast %6 : vector<1x256xf32> to vector<8x256xf32>
    %56 = arith.mulf %54, %55 : vector<8x256xf32>
    %c255_i32_15 = arith.constant 255 : i32
    %57 = tpu.dynamic_rotate %44 by %c255_i32_15 dim 1 : vector<8x256xf32>, i32 -> vector<8x256xf32>
    %58 = vector.broadcast %7 : vector<1x256xf32> to vector<8x256xf32>
    %59 = arith.mulf %57, %58 : vector<8x256xf32>
    %c241_i32_16 = arith.constant 241 : i32
    %60 = tpu.dynamic_rotate %44 by %c241_i32_16 dim 1 : vector<8x256xf32>, i32 -> vector<8x256xf32>
    %61 = vector.broadcast %8 : vector<1x256xf32> to vector<8x256xf32>
    %62 = arith.mulf %60, %61 : vector<8x256xf32>
    %c240_i32_17 = arith.constant 240 : i32
    %63 = tpu.dynamic_rotate %44 by %c240_i32_17 dim 1 : vector<8x256xf32>, i32 -> vector<8x256xf32>
    %64 = vector.broadcast %9 : vector<1x256xf32> to vector<8x256xf32>
    %65 = arith.mulf %63, %64 : vector<8x256xf32>
    %c239_i32_18 = arith.constant 239 : i32
    %66 = tpu.dynamic_rotate %44 by %c239_i32_18 dim 1 : vector<8x256xf32>, i32 -> vector<8x256xf32>
    %67 = vector.broadcast %10 : vector<1x256xf32> to vector<8x256xf32>
    %68 = arith.mulf %66, %67 : vector<8x256xf32>
    %69 = tpu.concatenate %47, %50, %53, %56, %44, %59, %62, %65, %68 in 0 : vector<8x256xf32>, vector<8x256xf32>, vector<8x256xf32>, vector<8x256xf32>, vector<8x256xf32>, vector<8x256xf32>, vector<8x256xf32>, vector<8x256xf32>, vector<8x256xf32> -> vector<72x256xf32>
    %c1 = arith.constant 1 : index
    %c0_19 = arith.constant 0 : index
    %c0_20 = arith.constant 0 : index
    %70 = vector.load %arg2[%c1, %c0_19, %c0_20] : memref<4x8x72xf32, #tpu.memory_space<vmem>>, vector<1x8x72xf32>
    %71 = vector.shape_cast %70 : vector<1x8x72xf32> to vector<8x72xf32>
    %cst_21 = arith.constant dense<0.000000e+00> : vector<8x256xf32>
    %72 = tpu.matmul %71, %69, %cst_21 {dimension_numbers = #tpu.dot_dimension_numbers<[1], [0], [0], [1], [0, 0, 1, 1], [], []>} : vector<8x72xf32>, vector<72x256xf32>, vector<8x256xf32> -> vector<8x256xf32>
    %c1_22 = arith.constant 1 : index
    %c0_23 = arith.constant 0 : index
    %c0_24 = arith.constant 0 : index
    %73 = vector.load %arg3[%c1_22, %c0_23, %c0_24] : memref<4x8x1xf32, #tpu.memory_space<vmem>>, vector<1x8x1xf32>
    %74 = vector.shape_cast %73 : vector<1x8x1xf32> to vector<8x1xf32>
    %75 = vector.broadcast %74 : vector<8x1xf32> to vector<8x256xf32>
    %76 = arith.addf %72, %75 : vector<8x256xf32>
    %77 = arith.addf %76, %1 : vector<8x256xf32>
    %c17_i32_25 = arith.constant 17 : i32
    %78 = tpu.dynamic_rotate %77 by %c17_i32_25 dim 1 : vector<8x256xf32>, i32 -> vector<8x256xf32>
    %79 = vector.broadcast %3 : vector<1x256xf32> to vector<8x256xf32>
    %80 = arith.mulf %78, %79 : vector<8x256xf32>
    %c16_i32_26 = arith.constant 16 : i32
    %81 = tpu.dynamic_rotate %77 by %c16_i32_26 dim 1 : vector<8x256xf32>, i32 -> vector<8x256xf32>
    %82 = vector.broadcast %4 : vector<1x256xf32> to vector<8x256xf32>
    %83 = arith.mulf %81, %82 : vector<8x256xf32>
    %c15_i32_27 = arith.constant 15 : i32
    %84 = tpu.dynamic_rotate %77 by %c15_i32_27 dim 1 : vector<8x256xf32>, i32 -> vector<8x256xf32>
    %85 = vector.broadcast %5 : vector<1x256xf32> to vector<8x256xf32>
    %86 = arith.mulf %84, %85 : vector<8x256xf32>
    %c1_i32_28 = arith.constant 1 : i32
    %87 = tpu.dynamic_rotate %77 by %c1_i32_28 dim 1 : vector<8x256xf32>, i32 -> vector<8x256xf32>
    %88 = vector.broadcast %6 : vector<1x256xf32> to vector<8x256xf32>
    %89 = arith.mulf %87, %88 : vector<8x256xf32>
    %c255_i32_29 = arith.constant 255 : i32
    %90 = tpu.dynamic_rotate %77 by %c255_i32_29 dim 1 : vector<8x256xf32>, i32 -> vector<8x256xf32>
    %91 = vector.broadcast %7 : vector<1x256xf32> to vector<8x256xf32>
    %92 = arith.mulf %90, %91 : vector<8x256xf32>
    %c241_i32_30 = arith.constant 241 : i32
    %93 = tpu.dynamic_rotate %77 by %c241_i32_30 dim 1 : vector<8x256xf32>, i32 -> vector<8x256xf32>
    %94 = vector.broadcast %8 : vector<1x256xf32> to vector<8x256xf32>
    %95 = arith.mulf %93, %94 : vector<8x256xf32>
    %c240_i32_31 = arith.constant 240 : i32
    %96 = tpu.dynamic_rotate %77 by %c240_i32_31 dim 1 : vector<8x256xf32>, i32 -> vector<8x256xf32>
    %97 = vector.broadcast %9 : vector<1x256xf32> to vector<8x256xf32>
    %98 = arith.mulf %96, %97 : vector<8x256xf32>
    %c239_i32_32 = arith.constant 239 : i32
    %99 = tpu.dynamic_rotate %77 by %c239_i32_32 dim 1 : vector<8x256xf32>, i32 -> vector<8x256xf32>
    %100 = vector.broadcast %10 : vector<1x256xf32> to vector<8x256xf32>
    %101 = arith.mulf %99, %100 : vector<8x256xf32>
    %102 = tpu.concatenate %80, %83, %86, %89, %77, %92, %95, %98, %101 in 0 : vector<8x256xf32>, vector<8x256xf32>, vector<8x256xf32>, vector<8x256xf32>, vector<8x256xf32>, vector<8x256xf32>, vector<8x256xf32>, vector<8x256xf32>, vector<8x256xf32> -> vector<72x256xf32>
    %c2 = arith.constant 2 : index
    %c0_33 = arith.constant 0 : index
    %c0_34 = arith.constant 0 : index
    %103 = vector.load %arg2[%c2, %c0_33, %c0_34] : memref<4x8x72xf32, #tpu.memory_space<vmem>>, vector<1x8x72xf32>
    %104 = vector.shape_cast %103 : vector<1x8x72xf32> to vector<8x72xf32>
    %cst_35 = arith.constant dense<0.000000e+00> : vector<8x256xf32>
    %105 = tpu.matmul %104, %102, %cst_35 {dimension_numbers = #tpu.dot_dimension_numbers<[1], [0], [0], [1], [0, 0, 1, 1], [], []>} : vector<8x72xf32>, vector<72x256xf32>, vector<8x256xf32> -> vector<8x256xf32>
    %c2_36 = arith.constant 2 : index
    %c0_37 = arith.constant 0 : index
    %c0_38 = arith.constant 0 : index
    %106 = vector.load %arg3[%c2_36, %c0_37, %c0_38] : memref<4x8x1xf32, #tpu.memory_space<vmem>>, vector<1x8x1xf32>
    %107 = vector.shape_cast %106 : vector<1x8x1xf32> to vector<8x1xf32>
    %108 = vector.broadcast %107 : vector<8x1xf32> to vector<8x256xf32>
    %109 = arith.addf %105, %108 : vector<8x256xf32>
    %cst_39 = arith.constant 0.000000e+00 : f32
    %110 = vector.broadcast %cst_39 : f32 to vector<8x256xf32>
    %111 = arith.maximumf %109, %110 : vector<8x256xf32>
    %c17_i32_40 = arith.constant 17 : i32
    %112 = tpu.dynamic_rotate %111 by %c17_i32_40 dim 1 : vector<8x256xf32>, i32 -> vector<8x256xf32>
    %113 = vector.broadcast %3 : vector<1x256xf32> to vector<8x256xf32>
    %114 = arith.mulf %112, %113 : vector<8x256xf32>
    %c16_i32_41 = arith.constant 16 : i32
    %115 = tpu.dynamic_rotate %111 by %c16_i32_41 dim 1 : vector<8x256xf32>, i32 -> vector<8x256xf32>
    %116 = vector.broadcast %4 : vector<1x256xf32> to vector<8x256xf32>
    %117 = arith.mulf %115, %116 : vector<8x256xf32>
    %c15_i32_42 = arith.constant 15 : i32
    %118 = tpu.dynamic_rotate %111 by %c15_i32_42 dim 1 : vector<8x256xf32>, i32 -> vector<8x256xf32>
    %119 = vector.broadcast %5 : vector<1x256xf32> to vector<8x256xf32>
    %120 = arith.mulf %118, %119 : vector<8x256xf32>
    %c1_i32_43 = arith.constant 1 : i32
    %121 = tpu.dynamic_rotate %111 by %c1_i32_43 dim 1 : vector<8x256xf32>, i32 -> vector<8x256xf32>
    %122 = vector.broadcast %6 : vector<1x256xf32> to vector<8x256xf32>
    %123 = arith.mulf %121, %122 : vector<8x256xf32>
    %c255_i32_44 = arith.constant 255 : i32
    %124 = tpu.dynamic_rotate %111 by %c255_i32_44 dim 1 : vector<8x256xf32>, i32 -> vector<8x256xf32>
    %125 = vector.broadcast %7 : vector<1x256xf32> to vector<8x256xf32>
    %126 = arith.mulf %124, %125 : vector<8x256xf32>
    %c241_i32_45 = arith.constant 241 : i32
    %127 = tpu.dynamic_rotate %111 by %c241_i32_45 dim 1 : vector<8x256xf32>, i32 -> vector<8x256xf32>
    %128 = vector.broadcast %8 : vector<1x256xf32> to vector<8x256xf32>
    %129 = arith.mulf %127, %128 : vector<8x256xf32>
    %c240_i32_46 = arith.constant 240 : i32
    %130 = tpu.dynamic_rotate %111 by %c240_i32_46 dim 1 : vector<8x256xf32>, i32 -> vector<8x256xf32>
    %131 = vector.broadcast %9 : vector<1x256xf32> to vector<8x256xf32>
    %132 = arith.mulf %130, %131 : vector<8x256xf32>
    %c239_i32_47 = arith.constant 239 : i32
    %133 = tpu.dynamic_rotate %111 by %c239_i32_47 dim 1 : vector<8x256xf32>, i32 -> vector<8x256xf32>
    %134 = vector.broadcast %10 : vector<1x256xf32> to vector<8x256xf32>
    %135 = arith.mulf %133, %134 : vector<8x256xf32>
    %136 = tpu.concatenate %114, %117, %120, %123, %111, %126, %129, %132, %135 in 0 : vector<8x256xf32>, vector<8x256xf32>, vector<8x256xf32>, vector<8x256xf32>, vector<8x256xf32>, vector<8x256xf32>, vector<8x256xf32>, vector<8x256xf32>, vector<8x256xf32> -> vector<72x256xf32>
    %c3 = arith.constant 3 : index
    %c0_48 = arith.constant 0 : index
    %c0_49 = arith.constant 0 : index
    %137 = vector.load %arg2[%c3, %c0_48, %c0_49] : memref<4x8x72xf32, #tpu.memory_space<vmem>>, vector<1x8x72xf32>
    %138 = vector.shape_cast %137 : vector<1x8x72xf32> to vector<8x72xf32>
    %cst_50 = arith.constant dense<0.000000e+00> : vector<8x256xf32>
    %139 = tpu.matmul %138, %136, %cst_50 {dimension_numbers = #tpu.dot_dimension_numbers<[1], [0], [0], [1], [0, 0, 1, 1], [], []>} : vector<8x72xf32>, vector<72x256xf32>, vector<8x256xf32> -> vector<8x256xf32>
    %c3_51 = arith.constant 3 : index
    %c0_52 = arith.constant 0 : index
    %c0_53 = arith.constant 0 : index
    %140 = vector.load %arg3[%c3_51, %c0_52, %c0_53] : memref<4x8x1xf32, #tpu.memory_space<vmem>>, vector<1x8x1xf32>
    %141 = vector.shape_cast %140 : vector<1x8x1xf32> to vector<8x1xf32>
    %142 = vector.broadcast %141 : vector<8x1xf32> to vector<8x256xf32>
    %143 = arith.addf %139, %142 : vector<8x256xf32>
    %144 = arith.addf %143, %77 : vector<8x256xf32>
    %c0_54 = arith.constant 0 : index
    %c0_55 = arith.constant 0 : index
    %c0_56 = arith.constant 0 : index
    %145 = vector.load %arg5[%c0_54, %c0_55, %c0_56] : memref<1x8x256xf32, #tpu.memory_space<vmem>>, vector<1x8x256xf32>
    %146 = vector.shape_cast %145 : vector<1x8x256xf32> to vector<8x256xf32>
    %147 = vector.shape_cast %144 : vector<8x256xf32> to vector<1x8x256xf32>
    tpu.vector_store %arg5[%c0_54, %c0_55, %c0_56], %147 {strides = array<i32>} : memref<1x8x256xf32, #tpu.memory_space<vmem>>, vector<1x8x256xf32>,
    return
  }
  func.func @transform_0(%arg0: i32) -> (i32, i32, i32) {
    %c0_i32 = arith.constant 0 : i32
    %c0_i32_0 = arith.constant 0 : i32
    %c0_i32_1 = arith.constant 0 : i32
    return %arg0, %c0_i32, %c0_i32_0 : i32, i32, i32
  }
  func.func @transform_1(%arg0: i32) -> (i32, i32, i32) {
    %c0_i32 = arith.constant 0 : i32
    %c0_i32_0 = arith.constant 0 : i32
    %c0_i32_1 = arith.constant 0 : i32
    %c0_i32_2 = arith.constant 0 : i32
    return %c0_i32, %c0_i32_0, %c0_i32_1 : i32, i32, i32
  }
  func.func @transform_2(%arg0: i32) -> (i32, i32, i32) {
    %c0_i32 = arith.constant 0 : i32
    %c0_i32_0 = arith.constant 0 : i32
    %c0_i32_1 = arith.constant 0 : i32
    %c0_i32_2 = arith.constant 0 : i32
    return %c0_i32, %c0_i32_0, %c0_i32_1 : i32, i32, i32
  }
  func.func @transform_3(%arg0: i32) -> (i32, i32) {
    %c0_i32 = arith.constant 0 : i32
    %c0_i32_0 = arith.constant 0 : i32
    %c0_i32_1 = arith.constant 0 : i32
    return %c0_i32, %c0_i32_0 : i32, i32
  }
  func.func @transform_4(%arg0: i32) -> (i32, i32, i32) {
    %c0_i32 = arith.constant 0 : i32
    %c0_i32_0 = arith.constant 0 : i32
    %c0_i32_1 = arith.constant 0 : i32
    return %arg0, %c0_i32, %c0_i32_0 : i32, i32, i32
  }
}

</mosaic_0001>

<llo_original>
// kernel: tpu_custom_call.1
$region0: #{tpu_custom_call.1}
  #allocation0 [shape = 'u32[]', space=smem, size = 0x4, offset = 0x4, fixed_abs, tag = 'smem constant byte address 0x4 - core index']
  #allocation1 [shape = 'u32[144,128]{1,0:T(1,128)}', space=vmem, size = 0x12000, scoped, tag = 'internal scratch']
  %s0 = inlined_call_operand.vmem [shape: f32[2,8,256], index: 0, kind: input, shape index: {}]
  %s1 = inlined_call_operand.hbm [shape: f32[4,8,72], index: 1, kind: input, shape index: {}]
  %s2 = inlined_call_operand.vmem [shape: f32[4,8,1], index: 2, kind: input, shape index: {}]
  %s3 = inlined_call_operand.hbm [shape: f32[9,256], index: 3, kind: input, shape index: {}]
  %s4 = inlined_call_operand.hbm [shape: f32[2,8,256], index: 4, kind: output, shape index: {}]
  %s5 = sld [smem:[#allocation0]]
  $region57: #{tpu_custom_call.1} parent=0
    _
  %s7 = ssub.s32 1, %s5
  %s8 = scalar_select 0, %s7, %s5
  $region1: #{tpu_custom_call.1} parent=0
    #allocation2 [shape = 'u8[16384]{0}', space=vmem, size = 0x4000, scoped, tag = 'input window, operand 1, single buffered']
    #allocation3 [shape = 's32[2]{0}', space=sflag, size = 0x8, scoped, tag = 'scoped memory for tpu_custom_call.1']
    #allocation4 [shape = 's32[2]{0}', space=sflag, size = 0x8, scoped, tag = 'scoped memory for tpu_custom_call.1']
    #allocation5 [shape = 'u8[16384]{0}', space=vmem, size = 0x4000, scoped, tag = 'input window, operand 3, single buffered']
    #allocation6 [shape = 's32[1]{0}', space=sflag, size = 0x4, scoped, tag = 'scoped memory for tpu_custom_call.1']
    #allocation7 [shape = 'u8[16384]{0}', space=vmem, size = 0x4000, scoped, tag = 'output window, operand 0']
    %9 = vsyncpa [#allocation3], 0
    %10 = vsyncpa [#allocation6], 0
    %11 = vsyncpa [#allocation4], 0
    %s12 = scalar_lea.sflag [#allocation4], 1
    %13 = vsyncpa %s12, 0
    loop: start=0, step=1, limit=4
    $region2: #{tpu_custom_call.1} parent=1 // loop_pre_header
      _
    $region3: #{tpu_custom_call.1} parent=1 // loop_header
      %s15 = sphi 0, %s19
      %p16 = scmp.ge.s32.totalorder %s15, 4
      %s25 = sphi 0, %s27
      %s28 = sphi 0, %s25
      %s29 = sphi 0, %s28
      %s45 = sphi 0, %s29
      %s49 = sphi 0, %s49
      %s51 = sphi 0, %s49
      %s52 = sphi 0, %s51
      %s66 = sphi 0, %s52
      %s70 = sphi 0, %s70
      %s72 = sphi 0, %s70
      %s73 = sphi 0, %s72
      %s87 = sphi 0, %s73
      %s91 = sphi 0, %s91
      %s93 = sphi 0, %s91
      %s94 = sphi 0, %s93
      %s108 = sphi 0, %s94
      %s114 = sphi 0, %s116
      %s117 = sphi 0, %s114
      %s118 = sphi 0, %s117
      %s134 = sphi 0, %s118
    $region4: #{tpu_custom_call.1} parent=1 // loop_header_branch
      %18 = sbr.rel (%p16) target = $region8
    $region5: #{tpu_custom_call.1} parent=1 // loop_body
      %s20 = ssub.s32 %s15, 1
      %s21 = ssub.s32 %s15, 2
      %s22 = sadd.s32 %s15, 1
      %s23 = ssub.s32 %s15, %s22
      %p24 = scmp.eq.s32.totalorder %s23, 0
      %s26 = sadd.s32 %s25, 1
      %s27 = scalar_select %p24, %s25, %s26
      %p30 = pneg %p24
      %p31 = scmp.eq.s32.totalorder %s15, 1
      %p32 = por %p30, %p31
      %p33 = scmp.ne.s32.totalorder %s25, %s28
      %p34 = scmp.eq.s32.totalorder %s15, 0
      %p35 = por %p33, %p34
      %p36 = scmp.ne.s32.totalorder %s25, %s28
      %p37 = scmp.eq.s32.totalorder %s20, 1
      %p38 = por %p36, %p37
      %p39 = scmp.ne.s32.totalorder %s28, %s29
      %p40 = scmp.eq.s32.totalorder %s20, 0
      %p41 = por %p39, %p40
      %p42 = scmp.ne.s32.totalorder %s28, %s29
      %p43 = scmp.eq.s32.totalorder %s21, 1
      %p44 = por %p42, %p43
      %p46 = scmp.ne.s32.totalorder %s29, %s45
      %p47 = scmp.eq.s32.totalorder %s21, 0
      %p48 = por %p46, %p47
      %s50 = sadd.s32 %s49, 1
      %p53 = scmp.eq.s32.totalorder %s15, 1
      %p54 = scmp.ne.s32.totalorder %s49, %s51
      %p55 = scmp.eq.s32.totalorder %s15, 0
      %p56 = por %p54, %p55
      %p57 = scmp.ne.s32.totalorder %s49, %s51
      %p58 = scmp.eq.s32.totalorder %s20, 1
      %p59 = por %p57, %p58
      %p60 = scmp.ne.s32.totalorder %s51, %s52
      %p61 = scmp.eq.s32.totalorder %s20, 0
      %p62 = por %p60, %p61
      %p63 = scmp.ne.s32.totalorder %s51, %s52
      %p64 = scmp.eq.s32.totalorder %s21, 1
      %p65 = por %p63, %p64
      %p67 = scmp.ne.s32.totalorder %s52, %s66
      %p68 = scmp.eq.s32.totalorder %s21, 0
      %p69 = por %p67, %p68
      %s71 = sadd.s32 %s70, 1
      %p74 = scmp.eq.s32.totalorder %s15, 1
      %p75 = scmp.ne.s32.totalorder %s70, %s72
      %p76 = scmp.eq.s32.totalorder %s15, 0
      %p77 = por %p75, %p76
      %p78 = scmp.ne.s32.totalorder %s70, %s72
      %p79 = scmp.eq.s32.totalorder %s20, 1
      %p80 = por %p78, %p79
      %p81 = scmp.ne.s32.totalorder %s72, %s73
      %p82 = scmp.eq.s32.totalorder %s20, 0
      %p83 = por %p81, %p82
      %p84 = scmp.ne.s32.totalorder %s72, %s73
      %p85 = scmp.eq.s32.totalorder %s21, 1
      %p86 = por %p84, %p85
      %p88 = scmp.ne.s32.totalorder %s73, %s87
      %p89 = scmp.eq.s32.totalorder %s21, 0
      %p90 = por %p88, %p89
      %s92 = sadd.s32 %s91, 1
      %p95 = scmp.eq.s32.totalorder %s15, 1
      %p96 = scmp.ne.s32.totalorder %s91, %s93
      %p97 = scmp.eq.s32.totalorder %s15, 0
      %p98 = por %p96, %p97
      %p99 = scmp.ne.s32.totalorder %s91, %s93
      %p100 = scmp.eq.s32.totalorder %s20, 1
      %p101 = por %p99, %p100
      %p102 = scmp.ne.s32.totalorder %s93, %s94
      %p103 = scmp.eq.s32.totalorder %s20, 0
      %p104 = por %p102, %p103
      %p105 = scmp.ne.s32.totalorder %s93, %s94
      %p106 = scmp.eq.s32.totalorder %s21, 1
      %p107 = por %p105, %p106
      %p109 = scmp.ne.s32.totalorder %s94, %s108
      %p110 = scmp.eq.s32.totalorder %s21, 0
      %p111 = por %p109, %p110
      %s112 = ssub.s32 %s15, %s22
      %p113 = scmp.eq.s32.totalorder %s112, 0
      %s115 = sadd.s32 %s114, 1
      %s116 = scalar_select %p113, %s114, %s115
      %p119 = pneg %p113
      %p120 = scmp.eq.s32.totalorder %s15, 1
      %p121 = por %p119, %p120
      %p122 = scmp.ne.s32.totalorder %s114, %s117
      %p123 = scmp.eq.s32.totalorder %s15, 0
      %p124 = por %p122, %p123
      %p125 = scmp.ne.s32.totalorder %s114, %s117
      %p126 = scmp.eq.s32.totalorder %s20, 1
      %p127 = por %p125, %p126
      %p128 = scmp.ne.s32.totalorder %s117, %s118
      %p129 = scmp.eq.s32.totalorder %s20, 0
      %p130 = por %p128, %p129
      %p131 = scmp.ne.s32.totalorder %s117, %s118
      %p132 = scmp.eq.s32.totalorder %s21, 1
      %p133 = por %p131, %p132
      %p135 = scmp.ne.s32.totalorder %s118, %s134
      %p136 = scmp.eq.s32.totalorder %s21, 0
      %p137 = por %p135, %p136
      %p138 = scmp.le.s32.totalorder 1, %s15
      %p139 = scmp.lt.s32.totalorder %s15, 3
      %p140 = pnand %p138, %p139
      %p141 = pneg %p140
      // Predicated region
      $region9: #{tpu_custom_call.1} parent=5 // pred_check
        _
      $region10: #{tpu_custom_call.1} parent=5 // pred_check_branch
        %143 = sbr.rel (%p140) target = $region12
      $region11: #{tpu_custom_call.1} parent=5 // pred_region
        %s144 = ssub.s32 %s15, 1
        // Predicated region
        $region13: #{tpu_custom_call.1} parent=11 // pred_check
          %p145 = pneg %p62
        $region14: #{tpu_custom_call.1} parent=11 // pred_check_branch
          %147 = sbr.rel (%p145) target = $region16
        $region15: #{tpu_custom_call.1} parent=11 // pred_region
          %s149 = ssub.s32 512, 512
          %150 = vsyncadd [#allocation3], %s149
          %s151 = sshll.u32 [#allocation2], 4
          %s152 = int_to_ptr.vmem [resolvable:$true] %s151
          %157 = dma.hbm_to_vmem [thread:$0]  %s1, 512, %s152, [#allocation3], 128, 128, 8
        $region16: #{tpu_custom_call.1} parent=11 // pred_fallthru
          _
        // Predicated region
        $region17: #{tpu_custom_call.1} parent=11 // pred_check
          %p158 = pneg %p83
        $region18: #{tpu_custom_call.1} parent=11 // pred_check_branch
          %160 = sbr.rel (%p158) target = $region20
        $region19: #{tpu_custom_call.1} parent=11 // pred_region
          _
        $region20: #{tpu_custom_call.1} parent=11 // pred_fallthru
          _
        // Predicated region
        $region21: #{tpu_custom_call.1} parent=11 // pred_check
          %p161 = pneg %p104
        $region22: #{tpu_custom_call.1} parent=11 // pred_check_branch
          %163 = sbr.rel (%p161) target = $region24
        $region23: #{tpu_custom_call.1} parent=11 // pred_region
          %s165 = ssub.s32 512, 512
          %166 = vsyncadd [#allocation6], %s165
          %s167 = sshll.u32 [#allocation5], 4
          %s168 = int_to_ptr.vmem [resolvable:$true] %s167
          %173 = dma.hbm_to_vmem [thread:$0]  %s3, 512, %s168, [#allocation6], 256, 256, 16
        $region24: #{tpu_custom_call.1} parent=11 // pred_fallthru
          _
      $region12: #{tpu_custom_call.1} parent=5 // pred_fallthru
        _
      %p174 = scmp.lt.s32.totalorder %s15, 2
      // Predicated region
      $region25: #{tpu_custom_call.1} parent=5 // pred_check
        %p175 = pneg %p174
      $region26: #{tpu_custom_call.1} parent=5 // pred_check_branch
        %177 = sbr.rel (%p175) target = $region28
      $region27: #{tpu_custom_call.1} parent=5 // pred_region
        // Predicated region
        $region29: #{tpu_custom_call.1} parent=27 // pred_check
          %p178 = pneg %p35
        $region30: #{tpu_custom_call.1} parent=27 // pred_check_branch
          %180 = sbr.rel (%p178) target = $region32
        $region31: #{tpu_custom_call.1} parent=27 // pred_region
          %p181 = scmp.lt.s32.totalorder %s15, 1
          %s182 = scalar_select %p181, %s15, 1
          %s183 = smul.addr %s182, 2
          %s184 = smul.addr %s183, 8
          %s185 = scalar_lea.vmem %s0, %s184
        $region32: #{tpu_custom_call.1} parent=27 // pred_fallthru
          _
      $region28: #{tpu_custom_call.1} parent=5 // pred_fallthru
        _
      %p186 = scmp.le.s32.totalorder 1, %s15
      %p187 = scmp.lt.s32.totalorder %s15, 3
      %p188 = pnand %p186, %p187
      %p189 = pneg %p188
      // Predicated region
      $region33: #{tpu_custom_call.1} parent=5 // pred_check
        _
      $region34: #{tpu_custom_call.1} parent=5 // pred_check_branch
        %191 = sbr.rel (%p188) target = $region36
      $region35: #{tpu_custom_call.1} parent=5 // pred_region
        %s192 = ssub.s32 %s15, 1
        // Predicated region
        $region37: #{tpu_custom_call.1} parent=35 // pred_check
          %p193 = pneg %p62
        $region38: #{tpu_custom_call.1} parent=35 // pred_check_branch
          %195 = sbr.rel (%p193) target = $region40
        $region39: #{tpu_custom_call.1} parent=35 // pred_region
          %196 = dma.done [#allocation3], 512
        $region40: #{tpu_custom_call.1} parent=35 // pred_fallthru
          _
        // Predicated region
        $region41: #{tpu_custom_call.1} parent=35 // pred_check
          %p197 = pneg %p104
        $region42: #{tpu_custom_call.1} parent=35 // pred_check_branch
          %199 = sbr.rel (%p197) target = $region44
        $region43: #{tpu_custom_call.1} parent=35 // pred_region
          %200 = dma.done [#allocation6], 512
        $region44: #{tpu_custom_call.1} parent=35 // pred_fallthru
          _
        %p201 = scmp.lt.s32.totalorder %s20, 1
        %s202 = scalar_select %p201, %s20, 1
        %s203 = smul.addr %s202, 2
        %s204 = smul.addr %s203, 8
        %s205 = scalar_lea.vmem %s0, %s204
        %p206 = pneg %p41
        %p207 = pneg %p38
        %p208 = pneg %p62
        %p209 = pneg %p59
        %p210 = pneg %p83
        %p211 = pneg %p80
        %p212 = pneg %p104
        %p213 = pneg %p101
        %p214 = pneg %p130
        %p215 = pneg %p127
        %s216 = sand.u32 %s117, 1
        %s217 = scalar_lea.sflag [#allocation4], %s216
        %s218 = sand.u32 %s117, 1
        %s219 = smul.addr %s218, 16
        %s220 = scalar_lea.vmem [#allocation7], %s219
        %p221 = scmp.lt.s32.totalorder %s20, 1
        %s222 = scalar_select %p221, %s20, 1
        %s223 = smul.addr %s222, 2
        %s224 = smul.addr %s223, 8
        %s225 = scalar_lea.vmem %s0, %s224
        %v226 = vld [vmem:[%s225] sm:$0xff]
        %v227 = vld [vmem:[%s225 + $0x8] sm:$0xff]
        %v228 = vld [vmem:[#allocation5] sm:$0xff]
        %v229 = vld [vmem:[#allocation5 + $0x8] sm:$0xff]
        %v230 = vld [vmem:[#allocation5 + $0x10] sm:$0x1]
        %v231 = vld [vmem:[#allocation5 + $0x18] sm:$0x1]
        %232 = vrot.lane.b32.xlu0 %v226, 17
        %v233 = vpop.permute.xlu0 %232
        %234 = vrot.lane.b32.xlu0 %v227, 17
        %v235 = vpop.permute.xlu0 %234
        %v236 = vlaneseq
        %v237 = vand.u32 %v236, 127
        %vm238 = vcmp.lt.s32.totalorder %v237, 17
        %v239 = vsel %vm238, %v233, %v235
        %v240 = vsel %vm238, %v235, %v233
        %v241 = vlaneseq
        %v242 = vshrl.u32 %v241, 7
        %v243 = vsub.s32 0, %v242
        %v244 = vrot.slane %v228, %v243
        %v245 = vlaneseq
        %v246 = vshrl.u32 %v245, 7
        %v247 = vsub.s32 0, %v246
        %v248 = vrot.slane %v229, %v247
        %v249 = vmul.f32 %v240, %v244
        %v250 = vmul.f32 %v239, %v248
        %251 = vrot.lane.b32.xlu0 %v226, 16
        %v252 = vpop.permute.xlu0 %251
        %253 = vrot.lane.b32.xlu0 %v227, 16
        %v254 = vpop.permute.xlu0 %253
        %vm255 = vcmp.lt.s32.totalorder %v237, 16
        %v256 = vsel %vm255, %v252, %v254
        %v257 = vsel %vm255, %v254, %v252
        %v258 = vlaneseq
        %v259 = vshrl.u32 %v258, 7
        %v260 = vsub.s32 1, %v259
        %v261 = vrot.slane %v228, %v260
        %v262 = vlaneseq
        %v263 = vshrl.u32 %v262, 7
        %v264 = vsub.s32 1, %v263
        %v265 = vrot.slane %v229, %v264
        %v266 = vmul.f32 %v257, %v261
        %v267 = vmul.f32 %v256, %v265
        %268 = vrot.lane.b32.xlu0 %v226, 15
        %v269 = vpop.permute.xlu0 %268
        %270 = vrot.lane.b32.xlu0 %v227, 15
        %v271 = vpop.permute.xlu0 %270
        %vm272 = vcmp.lt.s32.totalorder %v237, 15
        %v273 = vsel %vm272, %v269, %v271
        %v274 = vsel %vm272, %v271, %v269
        %v275 = vlaneseq
        %v276 = vshrl.u32 %v275, 7
        %v277 = vsub.s32 2, %v276
        %v278 = vrot.slane %v228, %v277
        %v279 = vlaneseq
        %v280 = vshrl.u32 %v279, 7
        %v281 = vsub.s32 2, %v280
        %v282 = vrot.slane %v229, %v281
        %v283 = vmul.f32 %v274, %v278
        %v284 = vmul.f32 %v273, %v282
        %285 = vrot.lane.b32.xlu0 %v226, 1
        %v286 = vpop.permute.xlu0 %285
        %287 = vrot.lane.b32.xlu0 %v227, 1
        %v288 = vpop.permute.xlu0 %287
        %vm289 = vcmp.lt.s32.totalorder %v237, 1
        %v290 = vsel %vm289, %v286, %v288
        %v291 = vsel %vm289, %v288, %v286
        %v292 = vlaneseq
        %v293 = vshrl.u32 %v292, 7
        %v294 = vsub.s32 3, %v293
        %v295 = vrot.slane %v228, %v294
        %v296 = vlaneseq
        %v297 = vshrl.u32 %v296, 7
        %v298 = vsub.s32 3, %v297
        %v299 = vrot.slane %v229, %v298
        %v300 = vmul.f32 %v291, %v295
        %v301 = vmul.f32 %v290, %v299
        %302 = vrot.lane.b32.xlu0 %v226, 127
        %v303 = vpop.permute.xlu0 %302
        %304 = vrot.lane.b32.xlu0 %v227, 127
        %v305 = vpop.permute.xlu0 %304
        %vm306 = vcmp.lt.s32.totalorder %v237, 127
        %v307 = vsel %vm306, %v303, %v305
        %v308 = vsel %vm306, %v305, %v303
        %v309 = vlaneseq
        %v310 = vshrl.u32 %v309, 7
        %v311 = vsub.s32 5, %v310
        %v312 = vrot.slane %v228, %v311
        %v313 = vlaneseq
        %v314 = vshrl.u32 %v313, 7
        %v315 = vsub.s32 5, %v314
        %v316 = vrot.slane %v229, %v315
        %v317 = vmul.f32 %v307, %v312
        %v318 = vmul.f32 %v308, %v316
        %319 = vrot.lane.b32.xlu0 %v226, 113
        %v320 = vpop.permute.xlu0 %319
        %321 = vrot.lane.b32.xlu0 %v227, 113
        %v322 = vpop.permute.xlu0 %321
        %vm323 = vcmp.lt.s32.totalorder %v237, 113
        %v324 = vsel %vm323, %v320, %v322
        %v325 = vsel %vm323, %v322, %v320
        %v326 = vlaneseq
        %v327 = vshrl.u32 %v326, 7
        %v328 = vsub.s32 6, %v327
        %v329 = vrot.slane %v228, %v328
        %v330 = vlaneseq
        %v331 = vshrl.u32 %v330, 7
        %v332 = vsub.s32 6, %v331
        %v333 = vrot.slane %v229, %v332
        %v334 = vmul.f32 %v324, %v329
        %v335 = vmul.f32 %v325, %v333
        %336 = vrot.lane.b32.xlu0 %v226, 112
        %v337 = vpop.permute.xlu0 %336
        %338 = vrot.lane.b32.xlu0 %v227, 112
        %v339 = vpop.permute.xlu0 %338
        %vm340 = vcmp.lt.s32.totalorder %v237, 112
        %v341 = vsel %vm340, %v337, %v339
        %v342 = vsel %vm340, %v339, %v337
        %v343 = vlaneseq
        %v344 = vshrl.u32 %v343, 7
        %v345 = vsub.s32 7, %v344
        %v346 = vrot.slane %v228, %v345
        %v347 = vlaneseq
        %v348 = vshrl.u32 %v347, 7
        %v349 = vsub.s32 7, %v348
        %v350 = vrot.slane %v229, %v349
        %v351 = vmul.f32 %v341, %v346
        %v352 = vmul.f32 %v342, %v350
        %353 = vrot.lane.b32.xlu0 %v226, 111
        %v354 = vpop.permute.xlu0 %353
        %355 = vrot.lane.b32.xlu0 %v227, 111
        %v356 = vpop.permute.xlu0 %355
        %vm357 = vcmp.lt.s32.totalorder %v237, 111
        %v358 = vsel %vm357, %v354, %v356
        %v359 = vsel %vm357, %v356, %v354
        %v360 = vlaneseq
        %v361 = vshrl.u32 %v360, 7
        %v362 = vsub.s32 0, %v361
        %v363 = vrot.slane %v230, %v362
        %v364 = vlaneseq
        %v365 = vshrl.u32 %v364, 7
        %v366 = vsub.s32 0, %v365
        %v367 = vrot.slane %v231, %v366
        %v368 = vmul.f32 %v358, %v363
        %v369 = vmul.f32 %v359, %v367
        %v370 = vld [vmem:[#allocation2] sm:$0xff]
        %v371 = vld [vmem:[%s2] sm:$0xff]
        %373 = vset.pattern.permute.xlu0 0
        %374 = vperm.xlu0 %373, %v371
        %v375 = vpop.permute.xlu0 %374
        %vm377 = vcmask 588800
        %v379 = vsel %vm377, %v370, 0
        %381 = vmatprep.subr.mxu0 %v250
        %382 = vmatpush1.msra.mxu0 %v249
        %383 = vmatprep.subr.mxu0 %v267
        %384 = vmatpush1.msra.mxu0 %v266
        %385 = vmatprep.subr.mxu0 %v284
        %386 = vmatpush1.msra.mxu0 %v283
        %387 = vmatprep.subr.mxu0 %v301
        %388 = vmatpush1.msra.mxu0 %v300
        %389 = vmatprep.subr.mxu0 %v227
        %390 = vmatpush1.msra.mxu0 %v226
        %391 = vmatprep.subr.mxu0 %v318
        %392 = vmatpush1.msra.mxu0 %v317
        %393 = vmatprep.subr.mxu0 %v335
        %394 = vmatpush1.msra.mxu0 %v334
        %395 = vmatprep.subr.mxu0 %v352
        %396 = vmatpush1.msra.mxu0 %v351
        %397 = vmatprep.subr.mxu0 %v369
        %398 = vmatpush1.msra.mxu0 %v368
        %399 = vmatprep.subr.mxu0 0.0
        %400 = vmatpush1.msra.mxu0 0.0
        %401 = vmatprep.subr.mxu0 0.0
        %402 = vmatpush1.msra.mxu0 0.0
        %403 = vmatprep.subr.mxu0 0.0
        %404 = vmatpush1.msra.mxu0 0.0
        %405 = vmatprep.subr.mxu0 0.0
        %406 = vmatpush1.msra.mxu0 0.0
        %407 = vmatprep.subr.mxu0 0.0
        %408 = vmatpush1.msra.mxu0 0.0
        %409 = vmatprep.subr.mxu0 0.0
        %410 = vmatpush1.msra.mxu0 0.0
        %411 = vmatprep.subr.mxu0 0.0
        %412 = vmatpush1.msra.mxu0 0.0
        %413 = vmatprep.subr.mxu0 0.0
        %414 = vmatpush1.msra.mxu0 0.0
        %415 = vmatprep.subr.mxu0 0.0
        %416 = vmatpush1.msra.mxu0 0.0
        %417 = vmatprep.subr.mxu0 0.0
        %418 = vmatpush1.msra.mxu0 0.0
        %419 = vmatprep.subr.mxu0 0.0
        %420 = vmatpush1.msra.mxu0 0.0
        %421 = vmatprep.subr.mxu0 0.0
        %422 = vmatpush1.msra.mxu0 0.0
        %423 = vmatprep.subr.mxu0 0.0
        %424 = vmatpush1.msra.mxu0 0.0
        %425 = vmatprep.subr.mxu0 0.0
        %426 = vmatpush1.msra.mxu0 0.0
        %427 = vmatprep.subr.mxu0 0.0
        %428 = vmatpush1.msra.mxu0 0.0
        %429 = vmatprep.subr.mxu0 0.0
        %430 = vmatpush1.msra.mxu0 0.0
        %431 = vmatprep.subr.mxu0 0.0
        %432 = vmatpush1.msra.mxu0 0.0
        %433 = vmatprep.subr.mxu0 0.0
        %434 = vmatpush1.msra.mxu0 0.0
        %435 = vmatprep.subr.mxu0 0.0
        %436 = vmatpush1.msra.mxu0 0.0
        %437 = vmatprep.subr.mxu0 0.0
        %438 = vmatpush1.msra.mxu0 0.0
        %439 = vmatprep.subr.mxu0 0.0
        %440 = vmatpush1.msra.mxu0 0.0
        %441 = vmatprep.subr.mxu0 0.0
        %442 = vmatpush1.msra.mxu0 0.0
        %443 = vmatprep.subr.mxu0 0.0
        %444 = vmatpush1.msra.mxu0 0.0
        %445 = vmatprep.mubr.f32.mxu0 0.0
        %446 = vmatmul.mubr.f32.gmra.mrb[0].mxu0 %v379
        %v447 = vpop.f32.mrb[0].mxu0
        %v448 = vadd.f32 %v375, %v447
        %v449 = vpop.f32.mrb[0].mxu0
        %v450 = vadd.f32 %v375, %v449
        %451 = vdwg.mxu0
        %v452 = vmax.f32 %v448, 0.0
        %v453 = vmax.f32 %v450, 0.0
        %454 = vrot.lane.b32.xlu0 %v452, 17
        %v455 = vpop.permute.xlu0 %454
        %456 = vrot.lane.b32.xlu0 %v453, 17
        %v457 = vpop.permute.xlu0 %456
        %v458 = vsel %vm238, %v455, %v457
        %v459 = vsel %vm238, %v457, %v455
        %v460 = vmul.f32 %v459, %v244
        %v461 = vmul.f32 %v458, %v248
        %462 = vrot.lane.b32.xlu0 %v452, 16
        %v463 = vpop.permute.xlu0 %462
        %464 = vrot.lane.b32.xlu0 %v453, 16
        %v465 = vpop.permute.xlu0 %464
        %v466 = vsel %vm255, %v463, %v465
        %v467 = vsel %vm255, %v465, %v463
        %v468 = vmul.f32 %v467, %v261
        %v469 = vmul.f32 %v466, %v265
        %470 = vrot.lane.b32.xlu0 %v452, 15
        %v471 = vpop.permute.xlu0 %470
        %472 = vrot.lane.b32.xlu0 %v453, 15
        %v473 = vpop.permute.xlu0 %472
        %v474 = vsel %vm272, %v471, %v473
        %v475 = vsel %vm272, %v473, %v471
        %v476 = vmul.f32 %v475, %v278
        %v477 = vmul.f32 %v474, %v282
        %478 = vrot.lane.b32.xlu0 %v452, 1
        %v479 = vpop.permute.xlu0 %478
        %480 = vrot.lane.b32.xlu0 %v453, 1
        %v481 = vpop.permute.xlu0 %480
        %v482 = vsel %vm289, %v479, %v481
        %v483 = vsel %vm289, %v481, %v479
        %v484 = vmul.f32 %v483, %v295
        %v485 = vmul.f32 %v482, %v299
        %486 = vrot.lane.b32.xlu0 %v452, 127
        %v487 = vpop.permute.xlu0 %486
        %488 = vrot.lane.b32.xlu0 %v453, 127
        %v489 = vpop.permute.xlu0 %488
        %v490 = vsel %vm306, %v487, %v489
        %v491 = vsel %vm306, %v489, %v487
        %v492 = vmul.f32 %v490, %v312
        %v493 = vmul.f32 %v491, %v316
        %494 = vrot.lane.b32.xlu0 %v452, 113
        %v495 = vpop.permute.xlu0 %494
        %496 = vrot.lane.b32.xlu0 %v453, 113
        %v497 = vpop.permute.xlu0 %496
        %v498 = vsel %vm323, %v495, %v497
        %v499 = vsel %vm323, %v497, %v495
        %v500 = vmul.f32 %v498, %v329
        %v501 = vmul.f32 %v499, %v333
        %502 = vrot.lane.b32.xlu0 %v452, 112
        %v503 = vpop.permute.xlu0 %502
        %504 = vrot.lane.b32.xlu0 %v453, 112
        %v505 = vpop.permute.xlu0 %504
        %v506 = vsel %vm340, %v503, %v505
        %v507 = vsel %vm340, %v505, %v503
        %v508 = vmul.f32 %v506, %v346
        %v509 = vmul.f32 %v507, %v350
        %510 = vrot.lane.b32.xlu0 %v452, 111
        %v511 = vpop.permute.xlu0 %510
        %512 = vrot.lane.b32.xlu0 %v453, 111
        %v513 = vpop.permute.xlu0 %512
        %v514 = vsel %vm357, %v511, %v513
        %v515 = vsel %vm357, %v513, %v511
        %v516 = vmul.f32 %v514, %v363
        %v517 = vmul.f32 %v515, %v367
        %s518 = scalar_lea.vmem [#allocation2], 8
        %v519 = vld [vmem:[%s518] sm:$0xff]
        %s520 = scalar_lea.vmem %s2, 8
        %v521 = vld [vmem:[%s520] sm:$0xff]
        %523 = vset.pattern.permute.xlu0 0
        %524 = vperm.xlu0 %523, %v521
        %v525 = vpop.permute.xlu0 %524
        %v528 = vsel %vm377, %v519, 0
        %530 = vmatprep.subr.mxu0 %v461
        %531 = vmatpush1.msra.mxu0 %v460
        %532 = vmatprep.subr.mxu0 %v469
        %533 = vmatpush1.msra.mxu0 %v468
        %534 = vmatprep.subr.mxu0 %v477
        %535 = vmatpush1.msra.mxu0 %v476
        %536 = vmatprep.subr.mxu0 %v485
        %537 = vmatpush1.msra.mxu0 %v484
        %538 = vmatprep.subr.mxu0 %v453
        %539 = vmatpush1.msra.mxu0 %v452
        %540 = vmatprep.subr.mxu0 %v493
        %541 = vmatpush1.msra.mxu0 %v492
        %542 = vmatprep.subr.mxu0 %v501
        %543 = vmatpush1.msra.mxu0 %v500
        %544 = vmatprep.subr.mxu0 %v509
        %545 = vmatpush1.msra.mxu0 %v508
        %546 = vmatprep.subr.mxu0 %v517
        %547 = vmatpush1.msra.mxu0 %v516
        %548 = vmatprep.subr.mxu0 0.0
        %549 = vmatpush1.msra.mxu0 0.0
        %550 = vmatprep.subr.mxu0 0.0
        %551 = vmatpush1.msra.mxu0 0.0
        %552 = vmatprep.subr.mxu0 0.0
        %553 = vmatpush1.msra.mxu0 0.0
        %554 = vmatprep.subr.mxu0 0.0
        %555 = vmatpush1.msra.mxu0 0.0
        %556 = vmatprep.subr.mxu0 0.0
        %557 = vmatpush1.msra.mxu0 0.0
        %558 = vmatprep.subr.mxu0 0.0
        %559 = vmatpush1.msra.mxu0 0.0
        %560 = vmatprep.subr.mxu0 0.0
        %561 = vmatpush1.msra.mxu0 0.0
        %562 = vmatprep.subr.mxu0 0.0
        %563 = vmatpush1.msra.mxu0 0.0
        %564 = vmatprep.subr.mxu0 0.0
        %565 = vmatpush1.msra.mxu0 0.0
        %566 = vmatprep.subr.mxu0 0.0
        %567 = vmatpush1.msra.mxu0 0.0
        %568 = vmatprep.subr.mxu0 0.0
        %569 = vmatpush1.msra.mxu0 0.0
        %570 = vmatprep.subr.mxu0 0.0
        %571 = vmatpush1.msra.mxu0 0.0
        %572 = vmatprep.subr.mxu0 0.0
        %573 = vmatpush1.msra.mxu0 0.0
        %574 = vmatprep.subr.mxu0 0.0
        %575 = vmatpush1.msra.mxu0 0.0
        %576 = vmatprep.subr.mxu0 0.0
        %577 = vmatpush1.msra.mxu0 0.0
        %578 = vmatprep.subr.mxu0 0.0
        %579 = vmatpush1.msra.mxu0 0.0
        %580 = vmatprep.subr.mxu0 0.0
        %581 = vmatpush1.msra.mxu0 0.0
        %582 = vmatprep.subr.mxu0 0.0
        %583 = vmatpush1.msra.mxu0 0.0
        %584 = vmatprep.subr.mxu0 0.0
        %585 = vmatpush1.msra.mxu0 0.0
        %586 = vmatprep.subr.mxu0 0.0
        %587 = vmatpush1.msra.mxu0 0.0
        %588 = vmatprep.subr.mxu0 0.0
        %589 = vmatpush1.msra.mxu0 0.0
        %590 = vmatprep.subr.mxu0 0.0
        %591 = vmatpush1.msra.mxu0 0.0
        %592 = vmatprep.subr.mxu0 0.0
        %593 = vmatpush1.msra.mxu0 0.0
        %594 = vmatprep.mubr.f32.mxu0 0.0
        %595 = vmatmul.mubr.f32.gmra.mrb[0].mxu0 %v528
        %v596 = vpop.f32.mrb[0].mxu0
        %v597 = vadd.f32 %v525, %v596
        %v598 = vpop.f32.mrb[0].mxu0
        %v599 = vadd.f32 %v525, %v598
        %600 = vdwg.mxu0
        %v601 = vadd.f32 %v597, %v226
        %v602 = vadd.f32 %v599, %v227
        %603 = vrot.lane.b32.xlu0 %v601, 17
        %v604 = vpop.permute.xlu0 %603
        %605 = vrot.lane.b32.xlu0 %v602, 17
        %v606 = vpop.permute.xlu0 %605
        %v607 = vsel %vm238, %v604, %v606
        %v608 = vsel %vm238, %v606, %v604
        %v609 = vmul.f32 %v608, %v244
        %v610 = vmul.f32 %v607, %v248
        %611 = vrot.lane.b32.xlu0 %v601, 16
        %v612 = vpop.permute.xlu0 %611
        %613 = vrot.lane.b32.xlu0 %v602, 16
        %v614 = vpop.permute.xlu0 %613
        %v615 = vsel %vm255, %v612, %v614
        %v616 = vsel %vm255, %v614, %v612
        %v617 = vmul.f32 %v616, %v261
        %v618 = vmul.f32 %v615, %v265
        %619 = vrot.lane.b32.xlu0 %v601, 15
        %v620 = vpop.permute.xlu0 %619
        %621 = vrot.lane.b32.xlu0 %v602, 15
        %v622 = vpop.permute.xlu0 %621
        %v623 = vsel %vm272, %v620, %v622
        %v624 = vsel %vm272, %v622, %v620
        %v625 = vmul.f32 %v624, %v278
        %v626 = vmul.f32 %v623, %v282
        %627 = vrot.lane.b32.xlu0 %v601, 1
        %v628 = vpop.permute.xlu0 %627
        %629 = vrot.lane.b32.xlu0 %v602, 1
        %v630 = vpop.permute.xlu0 %629
        %v631 = vsel %vm289, %v628, %v630
        %v632 = vsel %vm289, %v630, %v628
        %v633 = vmul.f32 %v632, %v295
        %v634 = vmul.f32 %v631, %v299
        %635 = vrot.lane.b32.xlu0 %v601, 127
        %v636 = vpop.permute.xlu0 %635
        %637 = vrot.lane.b32.xlu0 %v602, 127
        %v638 = vpop.permute.xlu0 %637
        %v639 = vsel %vm306, %v636, %v638
        %v640 = vsel %vm306, %v638, %v636
        %v641 = vmul.f32 %v639, %v312
        %v642 = vmul.f32 %v640, %v316
        %643 = vrot.lane.b32.xlu0 %v601, 113
        %v644 = vpop.permute.xlu0 %643
        %645 = vrot.lane.b32.xlu0 %v602, 113
        %v646 = vpop.permute.xlu0 %645
        %v647 = vsel %vm323, %v644, %v646
        %v648 = vsel %vm323, %v646, %v644
        %v649 = vmul.f32 %v647, %v329
        %v650 = vmul.f32 %v648, %v333
        %651 = vrot.lane.b32.xlu0 %v601, 112
        %v652 = vpop.permute.xlu0 %651
        %653 = vrot.lane.b32.xlu0 %v602, 112
        %v654 = vpop.permute.xlu0 %653
        %v655 = vsel %vm340, %v652, %v654
        %v656 = vsel %vm340, %v654, %v652
        %v657 = vmul.f32 %v655, %v346
        %v658 = vmul.f32 %v656, %v350
        %659 = vrot.lane.b32.xlu0 %v601, 111
        %v660 = vpop.permute.xlu0 %659
        %661 = vrot.lane.b32.xlu0 %v602, 111
        %v662 = vpop.permute.xlu0 %661
        %v663 = vsel %vm357, %v660, %v662
        %v664 = vsel %vm357, %v662, %v660
        %v665 = vmul.f32 %v663, %v363
        %v666 = vmul.f32 %v664, %v367
        %s667 = scalar_lea.vmem [#allocation2], 16
        %v668 = vld [vmem:[%s667] sm:$0xff]
        %s669 = scalar_lea.vmem %s2, 16
        %v670 = vld [vmem:[%s669] sm:$0xff]
        %672 = vset.pattern.permute.xlu0 0
        %673 = vperm.xlu0 %672, %v670
        %v674 = vpop.permute.xlu0 %673
        %v677 = vsel %vm377, %v668, 0
        %679 = vmatprep.subr.mxu0 %v610
        %680 = vmatpush1.msra.mxu0 %v609
        %681 = vmatprep.subr.mxu0 %v618
        %682 = vmatpush1.msra.mxu0 %v617
        %683 = vmatprep.subr.mxu0 %v626
        %684 = vmatpush1.msra.mxu0 %v625
        %685 = vmatprep.subr.mxu0 %v634
        %686 = vmatpush1.msra.mxu0 %v633
        %687 = vmatprep.subr.mxu0 %v602
        %688 = vmatpush1.msra.mxu0 %v601
        %689 = vmatprep.subr.mxu0 %v642
        %690 = vmatpush1.msra.mxu0 %v641
        %691 = vmatprep.subr.mxu0 %v650
        %692 = vmatpush1.msra.mxu0 %v649
        %693 = vmatprep.subr.mxu0 %v658
        %694 = vmatpush1.msra.mxu0 %v657
        %695 = vmatprep.subr.mxu0 %v666
        %696 = vmatpush1.msra.mxu0 %v665
        %697 = vmatprep.subr.mxu0 0.0
        %698 = vmatpush1.msra.mxu0 0.0
        %699 = vmatprep.subr.mxu0 0.0
        %700 = vmatpush1.msra.mxu0 0.0
        %701 = vmatprep.subr.mxu0 0.0
        %702 = vmatpush1.msra.mxu0 0.0
        %703 = vmatprep.subr.mxu0 0.0
        %704 = vmatpush1.msra.mxu0 0.0
        %705 = vmatprep.subr.mxu0 0.0
        %706 = vmatpush1.msra.mxu0 0.0
        %707 = vmatprep.subr.mxu0 0.0
        %708 = vmatpush1.msra.mxu0 0.0
        %709 = vmatprep.subr.mxu0 0.0
        %710 = vmatpush1.msra.mxu0 0.0
        %711 = vmatprep.subr.mxu0 0.0
        %712 = vmatpush1.msra.mxu0 0.0
        %713 = vmatprep.subr.mxu0 0.0
        %714 = vmatpush1.msra.mxu0 0.0
        %715 = vmatprep.subr.mxu0 0.0
        %716 = vmatpush1.msra.mxu0 0.0
        %717 = vmatprep.subr.mxu0 0.0
        %718 = vmatpush1.msra.mxu0 0.0
        %719 = vmatprep.subr.mxu0 0.0
        %720 = vmatpush1.msra.mxu0 0.0
        %721 = vmatprep.subr.mxu0 0.0
        %722 = vmatpush1.msra.mxu0 0.0
        %723 = vmatprep.subr.mxu0 0.0
        %724 = vmatpush1.msra.mxu0 0.0
        %725 = vmatprep.subr.mxu0 0.0
        %726 = vmatpush1.msra.mxu0 0.0
        %727 = vmatprep.subr.mxu0 0.0
        %728 = vmatpush1.msra.mxu0 0.0
        %729 = vmatprep.subr.mxu0 0.0
        %730 = vmatpush1.msra.mxu0 0.0
        %731 = vmatprep.subr.mxu0 0.0
        %732 = vmatpush1.msra.mxu0 0.0
        %733 = vmatprep.subr.mxu0 0.0
        %734 = vmatpush1.msra.mxu0 0.0
        %735 = vmatprep.subr.mxu0 0.0
        %736 = vmatpush1.msra.mxu0 0.0
        %737 = vmatprep.subr.mxu0 0.0
        %738 = vmatpush1.msra.mxu0 0.0
        %739 = vmatprep.subr.mxu0 0.0
        %740 = vmatpush1.msra.mxu0 0.0
        %741 = vmatprep.subr.mxu0 0.0
        %742 = vmatpush1.msra.mxu0 0.0
        %743 = vmatprep.mubr.f32.mxu0 0.0
        %744 = vmatmul.mubr.f32.gmra.mrb[0].mxu0 %v677
        %v745 = vpop.f32.mrb[0].mxu0
        %v746 = vadd.f32 %v674, %v745
        %v747 = vpop.f32.mrb[0].mxu0
        %v748 = vadd.f32 %v674, %v747
        %749 = vdwg.mxu0
        %v750 = vmax.f32 %v746, 0.0
        %v751 = vmax.f32 %v748, 0.0
        %752 = vrot.lane.b32.xlu0 %v750, 17
        %v753 = vpop.permute.xlu0 %752
        %754 = vrot.lane.b32.xlu0 %v751, 17
        %v755 = vpop.permute.xlu0 %754
        %v756 = vsel %vm238, %v753, %v755
        %v757 = vsel %vm238, %v755, %v753
        %v758 = vmul.f32 %v757, %v244
        %v759 = vmul.f32 %v756, %v248
        %760 = vrot.lane.b32.xlu0 %v750, 16
        %v761 = vpop.permute.xlu0 %760
        %762 = vrot.lane.b32.xlu0 %v751, 16
        %v763 = vpop.permute.xlu0 %762
        %v764 = vsel %vm255, %v761, %v763
        %v765 = vsel %vm255, %v763, %v761
        %v766 = vmul.f32 %v765, %v261
        %v767 = vmul.f32 %v764, %v265
        %768 = vrot.lane.b32.xlu0 %v750, 15
        %v769 = vpop.permute.xlu0 %768
        %770 = vrot.lane.b32.xlu0 %v751, 15
        %v771 = vpop.permute.xlu0 %770
        %v772 = vsel %vm272, %v769, %v771
        %v773 = vsel %vm272, %v771, %v769
        %v774 = vmul.f32 %v773, %v278
        %v775 = vmul.f32 %v772, %v282
        %776 = vrot.lane.b32.xlu0 %v750, 1
        %v777 = vpop.permute.xlu0 %776
        %778 = vrot.lane.b32.xlu0 %v751, 1
        %v779 = vpop.permute.xlu0 %778
        %v780 = vsel %vm289, %v777, %v779
        %v781 = vsel %vm289, %v779, %v777
        %v782 = vmul.f32 %v781, %v295
        %v783 = vmul.f32 %v780, %v299
        %784 = vrot.lane.b32.xlu0 %v750, 127
        %v785 = vpop.permute.xlu0 %784
        %786 = vrot.lane.b32.xlu0 %v751, 127
        %v787 = vpop.permute.xlu0 %786
        %v788 = vsel %vm306, %v785, %v787
        %v789 = vsel %vm306, %v787, %v785
        %v790 = vmul.f32 %v788, %v312
        %v791 = vmul.f32 %v789, %v316
        %792 = vrot.lane.b32.xlu0 %v750, 113
        %v793 = vpop.permute.xlu0 %792
        %794 = vrot.lane.b32.xlu0 %v751, 113
        %v795 = vpop.permute.xlu0 %794
        %v796 = vsel %vm323, %v793, %v795
        %v797 = vsel %vm323, %v795, %v793
        %v798 = vmul.f32 %v796, %v329
        %v799 = vmul.f32 %v797, %v333
        %800 = vrot.lane.b32.xlu0 %v750, 112
        %v801 = vpop.permute.xlu0 %800
        %802 = vrot.lane.b32.xlu0 %v751, 112
        %v803 = vpop.permute.xlu0 %802
        %v804 = vsel %vm340, %v801, %v803
        %v805 = vsel %vm340, %v803, %v801
        %v806 = vmul.f32 %v804, %v346
        %v807 = vmul.f32 %v805, %v350
        %808 = vrot.lane.b32.xlu0 %v750, 111
        %v809 = vpop.permute.xlu0 %808
        %810 = vrot.lane.b32.xlu0 %v751, 111
        %v811 = vpop.permute.xlu0 %810
        %v812 = vsel %vm357, %v809, %v811
        %v813 = vsel %vm357, %v811, %v809
        %v814 = vmul.f32 %v812, %v363
        %v815 = vmul.f32 %v813, %v367
        %s816 = scalar_lea.vmem [#allocation2], 24
        %v817 = vld [vmem:[%s816] sm:$0xff]
        %s818 = scalar_lea.vmem %s2, 24
        %v819 = vld [vmem:[%s818] sm:$0xff]
        %821 = vset.pattern.permute.xlu0 0
        %822 = vperm.xlu0 %821, %v819
        %v823 = vpop.permute.xlu0 %822
        %v826 = vsel %vm377, %v817, 0
        %828 = vmatprep.subr.mxu0 %v759
        %829 = vmatpush1.msra.mxu0 %v758
        %830 = vmatprep.subr.mxu0 %v767
        %831 = vmatpush1.msra.mxu0 %v766
        %832 = vmatprep.subr.mxu0 %v775
        %833 = vmatpush1.msra.mxu0 %v774
        %834 = vmatprep.subr.mxu0 %v783
        %835 = vmatpush1.msra.mxu0 %v782
        %836 = vmatprep.subr.mxu0 %v751
        %837 = vmatpush1.msra.mxu0 %v750
        %838 = vmatprep.subr.mxu0 %v791
        %839 = vmatpush1.msra.mxu0 %v790
        %840 = vmatprep.subr.mxu0 %v799
        %841 = vmatpush1.msra.mxu0 %v798
        %842 = vmatprep.subr.mxu0 %v807
        %843 = vmatpush1.msra.mxu0 %v806
        %844 = vmatprep.subr.mxu0 %v815
        %845 = vmatpush1.msra.mxu0 %v814
        %846 = vmatprep.subr.mxu0 0.0
        %847 = vmatpush1.msra.mxu0 0.0
        %848 = vmatprep.subr.mxu0 0.0
        %849 = vmatpush1.msra.mxu0 0.0
        %850 = vmatprep.subr.mxu0 0.0
        %851 = vmatpush1.msra.mxu0 0.0
        %852 = vmatprep.subr.mxu0 0.0
        %853 = vmatpush1.msra.mxu0 0.0
        %854 = vmatprep.subr.mxu0 0.0
        %855 = vmatpush1.msra.mxu0 0.0
        %856 = vmatprep.subr.mxu0 0.0
        %857 = vmatpush1.msra.mxu0 0.0
        %858 = vmatprep.subr.mxu0 0.0
        %859 = vmatpush1.msra.mxu0 0.0
        %860 = vmatprep.subr.mxu0 0.0
        %861 = vmatpush1.msra.mxu0 0.0
        %862 = vmatprep.subr.mxu0 0.0
        %863 = vmatpush1.msra.mxu0 0.0
        %864 = vmatprep.subr.mxu0 0.0
        %865 = vmatpush1.msra.mxu0 0.0
        %866 = vmatprep.subr.mxu0 0.0
        %867 = vmatpush1.msra.mxu0 0.0
        %868 = vmatprep.subr.mxu0 0.0
        %869 = vmatpush1.msra.mxu0 0.0
        %870 = vmatprep.subr.mxu0 0.0
        %871 = vmatpush1.msra.mxu0 0.0
        %872 = vmatprep.subr.mxu0 0.0
        %873 = vmatpush1.msra.mxu0 0.0
        %874 = vmatprep.subr.mxu0 0.0
        %875 = vmatpush1.msra.mxu0 0.0
        %876 = vmatprep.subr.mxu0 0.0
        %877 = vmatpush1.msra.mxu0 0.0
        %878 = vmatprep.subr.mxu0 0.0
        %879 = vmatpush1.msra.mxu0 0.0
        %880 = vmatprep.subr.mxu0 0.0
        %881 = vmatpush1.msra.mxu0 0.0
        %882 = vmatprep.subr.mxu0 0.0
        %883 = vmatpush1.msra.mxu0 0.0
        %884 = vmatprep.subr.mxu0 0.0
        %885 = vmatpush1.msra.mxu0 0.0
        %886 = vmatprep.subr.mxu0 0.0
        %887 = vmatpush1.msra.mxu0 0.0
        %888 = vmatprep.subr.mxu0 0.0
        %889 = vmatpush1.msra.mxu0 0.0
        %890 = vmatprep.subr.mxu0 0.0
        %891 = vmatpush1.msra.mxu0 0.0
        %892 = vmatprep.mubr.f32.mxu0 0.0
        %893 = vmatmul.mubr.f32.gmra.mrb[0].mxu0 %v826
        %v894 = vpop.f32.mrb[0].mxu0
        %v895 = vadd.f32 %v823, %v894
        %v896 = vpop.f32.mrb[0].mxu0
        %v897 = vadd.f32 %v823, %v896
        %898 = vdwg.mxu0
        %v899 = vadd.f32 %v895, %v601
        %v900 = vadd.f32 %v897, %v602
        %901 = vst [vmem:[%s220] sm:$0xff] %v899
        %902 = vst [vmem:[%s220 + $0x8] sm:$0xff] %v900
        %s903 = sand.u32 %s117, 1
        %s904 = scalar_lea.sflag [#allocation4], %s903
        %s905 = sand.u32 %s117, 1
        %s906 = smul.addr %s905, 16
        %s907 = scalar_lea.vmem [#allocation7], %s906
        // Predicated region
        $region45: #{tpu_custom_call.1} parent=35 // pred_check
          %p908 = pneg %p127
        $region46: #{tpu_custom_call.1} parent=35 // pred_check_branch
          %910 = sbr.rel (%p908) target = $region48
        $region47: #{tpu_custom_call.1} parent=35 // pred_region
          %s912 = ssub.s32 256, 256
          %913 = vsyncadd %s904, %s912
          %s914 = smul.addr %s20, 2
          %s915 = smul.addr %s914, 128
          %s916 = scalar_lea.hbm %s4, %s915
          %s918 = sshll.u32 %s907, 4
          %s919 = int_to_ptr.vmem [resolvable:$true] %s918
          %921 = dma.vmem_to_hbm [thread:$0]  %s919, 256, %s916, %s904
        $region48: #{tpu_custom_call.1} parent=35 // pred_fallthru
          _
      $region36: #{tpu_custom_call.1} parent=5 // pred_fallthru
        _
      %p922 = scmp.le.s32.totalorder 2, %s15
      // Predicated region
      $region49: #{tpu_custom_call.1} parent=5 // pred_check
        %p923 = pneg %p922
      $region50: #{tpu_custom_call.1} parent=5 // pred_check_branch
        %925 = sbr.rel (%p923) target = $region52
      $region51: #{tpu_custom_call.1} parent=5 // pred_region
        %s926 = ssub.s32 %s15, 2
        // Predicated region
        $region53: #{tpu_custom_call.1} parent=51 // pred_check
          %p927 = pneg %p133
        $region54: #{tpu_custom_call.1} parent=51 // pred_check_branch
          %929 = sbr.rel (%p927) target = $region56
        $region55: #{tpu_custom_call.1} parent=51 // pred_region
          %s930 = sand.u32 %s118, 1
          %s931 = scalar_lea.sflag [#allocation4], %s930
          %s932 = sand.u32 %s118, 1
          %s933 = smul.addr %s932, 16
          %s934 = scalar_lea.vmem [#allocation7], %s933
          %935 = dma.done %s931, 256
        $region56: #{tpu_custom_call.1} parent=51 // pred_fallthru
          _
      $region52: #{tpu_custom_call.1} parent=5 // pred_fallthru
        _
    $region6: #{tpu_custom_call.1} parent=1 // loop_footer
      %s19 = sadd.s32 1, %s15
    $region7: #{tpu_custom_call.1} parent=1 // loop_footer_branch
      %14 = sbr.rel target = $region3
    $region8: #{tpu_custom_call.1} parent=1 // loop_exit
      _
    %936 = vsyncpa [#allocation3], 1
    %s937 = scalar_lea.sflag [#allocation3], 1
    %938 = vsyncpa %s937, 1
    %939 = vsyncpa [#allocation6], 1
    %940 = vsyncpa [#allocation4], 1
    %s941 = scalar_lea.sflag [#allocation4], 1
    %942 = vsyncpa %s941, 1

</llo_original>
